<compile_context>
chip_gen: v6e
topology: v6e:2x2x1
jax: 0.10.0
libtpu: 0.0.40
codegen_flags: <defaults>
</compile_context>

<pallas_src>
import functools

import jax
import jax.numpy as jnp
import numpy as np
from jax.experimental import pallas as pl
from jax.experimental.pallas import tpu as pltpu

EPS = 1e-5  # InstanceNorm2d default eps


# ---------------------------------------------------------------------------
# Fused Pallas kernel: Nb images per grid step.
# ---------------------------------------------------------------------------
def _resnet_block_kernel(x_ref, w1_ref, w2_ref, o_ref, *, W, bf16_taps):
    """Fused ResnetBlock forward for a block of Nb images.

    x_ref:  (Nb, C, H*W) f32   activations, spatial flattened on the lane axis
    w*_ref: (C, 9*C)     bf16  conv weights, tap-major / cin-minor (resident)
    o_ref:  (Nb, C, H*W) f32   output
    """
    Nb, C, HW = x_ref.shape

    # Flat spatial index -> image-boundary masks (shared by both convs and by
    # every image folded into this grid step).
    p = jax.lax.broadcasted_iota(jnp.int32, (C, HW), 1)
    top = p < W                      # row 0
    bot = p >= HW - W                # row H-1
    if (W & (W - 1)) == 0:           # power-of-two fast path for the column id
        col = jnp.bitwise_and(p, W - 1)
    else:
        col = p % W
    left = col == 0                  # col 0
    right = col == W - 1             # col W-1

    def taps3x3(a):
        """9 reflect-padded shifted copies of `a` (C, HW); tap order (dy, dx)
        row-major, matching the OIHW->(O,ky,kx,I) weight reshape."""
        up = jnp.roll(a, -W, axis=1)      # value of row i+1 (wraps at i=H-1)
        dn = jnp.roll(a, W, axis=1)       # value of row i-1 (wraps at i=0)
        r_m1 = jnp.where(top, up, dn)     # row i-1, reflected (row -1 -> 1)
        r_p1 = jnp.where(bot, dn, up)     # row i+1, reflected (row H -> H-2)
        taps = []
        for r in (r_m1, a, r_p1):         # dy = -1, 0, +1
            lf = jnp.roll(r, -1, axis=1)  # value of col j+1 (wraps at j=W-1)
            rt = jnp.roll(r, 1, axis=1)   # value of col j-1 (wraps at j=0)
            c_m1 = jnp.where(left, lf, rt)    # col j-1, reflected (-1 -> 1)
            c_p1 = jnp.where(right, rt, lf)   # col j+1, reflected (W -> W-2)
            taps += [c_m1, r, c_p1]       # dx = -1, 0, +1
        return taps

    w1 = w1_ref[...]                      # (C, 9C) bf16, loaded once per step
    w2 = w2_ref[...]

    def conv_in(a, w):
        """reflect-pad conv3x3 (im2col MXU matmul) + InstanceNorm.  No bias:
        it is mathematically absorbed by the mean subtraction of the
        affine=False InstanceNorm that follows each conv."""
        if bf16_taps:                     # v6e/v7x: roll/select/concat in bf16
            a = a.astype(jnp.bfloat16)
        patches = jnp.concatenate(taps3x3(a), axis=0)          # (9C, HW)
        if not bf16_taps:                 # v5e-safe default: cast only at MXU
            patches = patches.astype(jnp.bfloat16)
        y = jnp.dot(w, patches, preferred_element_type=jnp.float32)  # (C, HW) f32
        # Single-pass InstanceNorm statistics (sum & sum-of-squares together).
        m = jnp.mean(y, axis=-1, keepdims=True)
        ms = jnp.mean(y * y, axis=-1, keepdims=True)
        v = jnp.maximum(ms - m * m, 0.0)
        return (y - m) * jax.lax.rsqrt(v + EPS)

    # Static (fully unrolled) loop over the images folded into this grid step;
    # the intermediate activation never leaves VMEM and the residual uses the
    # x already resident in VMEM.
    for b in range(Nb):
        x = x_ref[b]                                          # (C, HW) f32
        h = jnp.maximum(conv_in(x, w1), 0.0)                  # conv1 + IN + ReLU
        o_ref[b] = (x + conv_in(h, w2)).astype(o_ref.dtype)   # conv2 + IN + skip


# ---------------------------------------------------------------------------
# Wrapper: weight repacking + pallas_call setup.
# ---------------------------------------------------------------------------
def resnet_block_forward(x, w1, b1, w2, b2, *, images_per_step=None,
                         bf16_taps=False):
    """x: (N, C, H, W) f32; w*: (C, C, 3, 3) f32; b*: (C,) f32 (see note)."""
    N, C, H, W = x.shape
    HW = H * W
    K = 9 * C

    # Biases are accepted for interface parity with the PyTorch module but are
    # intentionally NOT sent to the kernel: InstanceNorm(affine=False) directly
    # after each conv cancels a per-channel bias exactly (last=False config).
    del b1, b2

    if images_per_step is None:
        images_per_step = N      # fold the whole batch into one grid step
    nb = images_per_step
    if N % nb != 0:
        raise ValueError("images_per_step must divide the batch size")
    num_blocks = N // nb

    # (Cout, Cin, ky, kx) -> (Cout, ky, kx, Cin) -> (Cout, 9*Cin): tap-major /
    # cin-minor — the order in which the kernel stacks its shifted taps.  bf16
    # operands feed the MXU; accumulation stays f32 inside the kernel.
    w1m = jnp.transpose(w1, (0, 2, 3, 1)).reshape(C, K).astype(jnp.bfloat16)
    w2m = jnp.transpose(w2, (0, 2, 3, 1)).reshape(C, K).astype(jnp.bfloat16)

    x_flat = x.reshape(N, C, HW)

    kernel = functools.partial(_resnet_block_kernel, W=W, bf16_taps=bf16_taps)
    out = pl.pallas_call(
        kernel,
        out_shape=jax.ShapeDtypeStruct((N, C, HW), jnp.float32),
        grid=(num_blocks,),
        in_specs=[
            pl.BlockSpec((nb, C, HW), lambda n: (n, 0, 0)),   # x block (nb imgs)
            pl.BlockSpec((C, K), lambda n: (0, 0)),           # w1 (resident)
            pl.BlockSpec((C, K), lambda n: (0, 0)),           # w2 (resident)
        ],
        out_specs=pl.BlockSpec((nb, C, HW), lambda n: (n, 0, 0)),
        input_output_aliases={0: 0},                          # reuse x's buffer
        compiler_params=pltpu.CompilerParams(
            dimension_semantics=("parallel",)),               # v7x: TCs split blocks
    )(x_flat, w1m, w2m)

    return out.reshape(N, C, H, W)


# ---------------------------------------------------------------------------
# Pure-JAX reference mirroring the PyTorch module (bias INCLUDED — its exact
# cancellation by InstanceNorm is part of what the test verifies).  Conv
# operands are cast to bf16 (f32 accumulation) like the kernel's MXU path, so
# the comparison isolates structural correctness from operand precision.
# ---------------------------------------------------------------------------
def _reference(x, w1, b1, w2, b2):
    def conv(a, w, b):
        ap = jnp.pad(a, ((0, 0), (0, 0), (1, 1), (1, 1)), mode="reflect")
        y = jax.lax.conv_general_dilated(
            ap.astype(jnp.bfloat16), w.astype(jnp.bfloat16), (1, 1), "VALID",
            dimension_numbers=("NCHW", "OIHW", "NCHW"),
            preferred_element_type=jnp.float32,
            precision=jax.lax.Precision.HIGHEST)
        return y + b[None, :, None, None]

    def inorm(y):
        m = y.mean(axis=(2, 3), keepdims=True)
        v = ((y - m) ** 2).mean(axis=(2, 3), keepdims=True)
        return (y - m) * jax.lax.rsqrt(v + EPS)

    h = jax.nn.relu(inorm(conv(x, w1, b1)))
    return x + inorm(conv(h, w2, b2))


if __name__ == "__main__":
    # Small, deterministic problem: batch=2, dim=8 channels, 16x16 spatial.
    N, C, H, W = 2, 8, 16, 16
    key = jax.random.PRNGKey(0)
    kx, kw1, kb1, kw2, kb2 = jax.random.split(key, 5)

    x = jax.random.normal(kx, (N, C, H, W), dtype=jnp.float32)
    fan_in = C * 3 * 3
    w1 = jax.random.normal(kw1, (C, C, 3, 3), dtype=jnp.float32) / np.sqrt(fan_in)
    b1 = jax.random.normal(kb1, (C,), dtype=jnp.float32) * 0.1
    w2 = jax.random.normal(kw2, (C, C, 3, 3), dtype=jnp.float32) / np.sqrt(fan_in)
    b2 = jax.random.normal(kb2, (C,), dtype=jnp.float32) * 0.1

    out = jax.jit(resnet_block_forward)(x, w1, b1, w2, b2)
    out = jax.block_until_ready(out)

    ref = _reference(x, w1, b1, w2, b2)
    np.testing.assert_allclose(np.asarray(out), np.asarray(ref),
                               rtol=5e-3, atol=5e-3)
    print("KERNEL_OK")
</pallas_src>

<mosaic_0001>
module attributes {stable_mosaic.version = 11 : i64} {
  func.func @_resnet_block_kernel(%arg0: i32, %arg1: memref<2x8x256xf32, #tpu.memory_space<vmem>>, %arg2: memref<8x72xbf16, #tpu.memory_space<vmem>>, %arg3: memref<8x72xbf16, #tpu.memory_space<vmem>>, %arg4: memref<2x8x256xf32, #tpu.memory_space<vmem>>) attributes {dimension_semantics = [#tpu.dimension_semantics<parallel>], iteration_bounds = array<i64: 1>, scalar_prefetch = 0 : i64, scratch_operands = 0 : i64, tpu.core_type = #tpu.core_type<tc>, window_params = [{transform_indices = @transform_0, window_bounds = array<i64: 2, 8, 256>}, {pipeline_mode = #tpu.pipeline_mode<synchronous>, transform_indices = @transform_1, window_bounds = array<i64: 8, 72>}, {pipeline_mode = #tpu.pipeline_mode<synchronous>, transform_indices = @transform_2, window_bounds = array<i64: 8, 72>}, {transform_indices = @transform_3, window_bounds = array<i64: 2, 8, 256>}]} {
    %0 = tpu.iota {dimensions = array<i32: 1>} : vector<8x256xi32>
    %c16_i32 = arith.constant 16 : i32
    %1 = vector.broadcast %c16_i32 : i32 to vector<8x256xi32>
    %2 = arith.cmpi slt, %0, %1 : vector<8x256xi32>
    %c240_i32 = arith.constant 240 : i32
    %3 = vector.broadcast %c240_i32 : i32 to vector<8x256xi32>
    %4 = arith.cmpi sge, %0, %3 : vector<8x256xi32>
    %c15_i32 = arith.constant 15 : i32
    %5 = vector.broadcast %c15_i32 : i32 to vector<8x256xi32>
    %6 = arith.andi %0, %5 : vector<8x256xi32>
    %c0_i32 = arith.constant 0 : i32
    %7 = vector.broadcast %c0_i32 : i32 to vector<8x256xi32>
    %8 = arith.cmpi eq, %6, %7 : vector<8x256xi32>
    %c15_i32_0 = arith.constant 15 : i32
    %9 = vector.broadcast %c15_i32_0 : i32 to vector<8x256xi32>
    %10 = arith.cmpi eq, %6, %9 : vector<8x256xi32>
    %c0 = arith.constant 0 : index
    %c0_1 = arith.constant 0 : index
    %11 = vector.load %arg2[%c0, %c0_1] : memref<8x72xbf16, #tpu.memory_space<vmem>>, vector<8x72xbf16>
    %c0_2 = arith.constant 0 : index
    %c0_3 = arith.constant 0 : index
    %12 = vector.load %arg3[%c0_2, %c0_3] : memref<8x72xbf16, #tpu.memory_space<vmem>>, vector<8x72xbf16>
    %c0_4 = arith.constant 0 : index
    %c0_5 = arith.constant 0 : index
    %c0_6 = arith.constant 0 : index
    %13 = vector.load %arg1[%c0_4, %c0_5, %c0_6] : memref<2x8x256xf32, #tpu.memory_space<vmem>>, vector<1x8x256xf32>
    %14 = vector.shape_cast %13 : vector<1x8x256xf32> to vector<8x256xf32>
    %15 = vector.extract_strided_slice %14 {offsets = [0, 16], sizes = [8, 240], strides = [1, 1]} : vector<8x256xf32> to vector<8x240xf32>
    %16 = vector.extract_strided_slice %14 {offsets = [0, 0], sizes = [8, 16], strides = [1, 1]} : vector<8x256xf32> to vector<8x16xf32>
    %17 = tpu.concatenate %15, %16 in 1 : vector<8x240xf32>, vector<8x16xf32> -> vector<8x256xf32>
    %18 = vector.extract_strided_slice %14 {offsets = [0, 240], sizes = [8, 16], strides = [1, 1]} : vector<8x256xf32> to vector<8x16xf32>
    %19 = vector.extract_strided_slice %14 {offsets = [0, 0], sizes = [8, 240], strides = [1, 1]} : vector<8x256xf32> to vector<8x240xf32>
    %20 = tpu.concatenate %18, %19 in 1 : vector<8x16xf32>, vector<8x240xf32> -> vector<8x256xf32>
    %21 = arith.select %2, %17, %20 : vector<8x256xi1>, vector<8x256xf32>
    %22 = arith.select %4, %20, %17 : vector<8x256xi1>, vector<8x256xf32>
    %23 = vector.extract_strided_slice %21 {offsets = [0, 1], sizes = [8, 255], strides = [1, 1]} : vector<8x256xf32> to vector<8x255xf32>
    %24 = vector.extract_strided_slice %21 {offsets = [0, 0], sizes = [8, 1], strides = [1, 1]} : vector<8x256xf32> to vector<8x1xf32>
    %25 = tpu.concatenate %23, %24 in 1 : vector<8x255xf32>, vector<8x1xf32> -> vector<8x256xf32>
    %26 = vector.extract_strided_slice %21 {offsets = [0, 255], sizes = [8, 1], strides = [1, 1]} : vector<8x256xf32> to vector<8x1xf32>
    %27 = vector.extract_strided_slice %21 {offsets = [0, 0], sizes = [8, 255], strides = [1, 1]} : vector<8x256xf32> to vector<8x255xf32>
    %28 = tpu.concatenate %26, %27 in 1 : vector<8x1xf32>, vector<8x255xf32> -> vector<8x256xf32>
    %29 = arith.select %8, %25, %28 : vector<8x256xi1>, vector<8x256xf32>
    %30 = arith.select %10, %28, %25 : vector<8x256xi1>, vector<8x256xf32>
    %31 = vector.extract_strided_slice %14 {offsets = [0, 1], sizes = [8, 255], strides = [1, 1]} : vector<8x256xf32> to vector<8x255xf32>
    %32 = vector.extract_strided_slice %14 {offsets = [0, 0], sizes = [8, 1], strides = [1, 1]} : vector<8x256xf32> to vector<8x1xf32>
    %33 = tpu.concatenate %31, %32 in 1 : vector<8x255xf32>, vector<8x1xf32> -> vector<8x256xf32>
    %34 = vector.extract_strided_slice %14 {offsets = [0, 255], sizes = [8, 1], strides = [1, 1]} : vector<8x256xf32> to vector<8x1xf32>
    %35 = vector.extract_strided_slice %14 {offsets = [0, 0], sizes = [8, 255], strides = [1, 1]} : vector<8x256xf32> to vector<8x255xf32>
    %36 = tpu.concatenate %34, %35 in 1 : vector<8x1xf32>, vector<8x255xf32> -> vector<8x256xf32>
    %37 = arith.select %8, %33, %36 : vector<8x256xi1>, vector<8x256xf32>
    %38 = arith.select %10, %36, %33 : vector<8x256xi1>, vector<8x256xf32>
    %39 = vector.extract_strided_slice %22 {offsets = [0, 1], sizes = [8, 255], strides = [1, 1]} : vector<8x256xf32> to vector<8x255xf32>
    %40 = vector.extract_strided_slice %22 {offsets = [0, 0], sizes = [8, 1], strides = [1, 1]} : vector<8x256xf32> to vector<8x1xf32>
    %41 = tpu.concatenate %39, %40 in 1 : vector<8x255xf32>, vector<8x1xf32> -> vector<8x256xf32>
    %42 = vector.extract_strided_slice %22 {offsets = [0, 255], sizes = [8, 1], strides = [1, 1]} : vector<8x256xf32> to vector<8x1xf32>
    %43 = vector.extract_strided_slice %22 {offsets = [0, 0], sizes = [8, 255], strides = [1, 1]} : vector<8x256xf32> to vector<8x255xf32>
    %44 = tpu.concatenate %42, %43 in 1 : vector<8x1xf32>, vector<8x255xf32> -> vector<8x256xf32>
    %45 = arith.select %8, %41, %44 : vector<8x256xi1>, vector<8x256xf32>
    %46 = arith.select %10, %44, %41 : vector<8x256xi1>, vector<8x256xf32>
    %47 = tpu.concatenate %29, %21, %30, %37, %14, %38, %45, %22, %46 in 0 : vector<8x256xf32>, vector<8x256xf32>, vector<8x256xf32>, vector<8x256xf32>, vector<8x256xf32>, vector<8x256xf32>, vector<8x256xf32>, vector<8x256xf32>, vector<8x256xf32> -> vector<72x256xf32>
    %48 = arith.truncf %47 : vector<72x256xf32> to vector<72x256xbf16>
    %cst = arith.constant dense<0.000000e+00> : vector<8x256xf32>
    %49 = tpu.matmul %11, %48, %cst {dimension_numbers = #tpu.dot_dimension_numbers<[1], [0], [0], [1], [0, 0, 1, 1], [], []>} : vector<8x72xbf16>, vector<72x256xbf16>, vector<8x256xf32> -> vector<8x256xf32>
    %cst_7 = arith.constant dense<0.000000e+00> : vector<8xf32>
    %50 = vector.multi_reduction <add>, %49, %cst_7 [1] : vector<8x256xf32> to vector<8xf32>
    %51 = vector.shape_cast %50 : vector<8xf32> to vector<8x1xf32>
    %cst_8 = arith.constant 2.560000e+02 : f32
    %52 = vector.broadcast %cst_8 : f32 to vector<8x1xf32>
    %53 = arith.divf %51, %52 : vector<8x1xf32>
    %54 = arith.mulf %49, %49 : vector<8x256xf32>
    %cst_9 = arith.constant dense<0.000000e+00> : vector<8xf32>
    %55 = vector.multi_reduction <add>, %54, %cst_9 [1] : vector<8x256xf32> to vector<8xf32>
    %56 = vector.shape_cast %55 : vector<8xf32> to vector<8x1xf32>
    %cst_10 = arith.constant 2.560000e+02 : f32
    %57 = vector.broadcast %cst_10 : f32 to vector<8x1xf32>
    %58 = arith.divf %56, %57 : vector<8x1xf32>
    %59 = arith.mulf %53, %53 : vector<8x1xf32>
    %60 = arith.subf %58, %59 : vector<8x1xf32>
    %cst_11 = arith.constant 0.000000e+00 : f32
    %61 = vector.broadcast %cst_11 : f32 to vector<8x1xf32>
    %62 = arith.maximumf %60, %61 : vector<8x1xf32>
    %63 = vector.broadcast %53 : vector<8x1xf32> to vector<8x256xf32>
    %64 = arith.subf %49, %63 : vector<8x256xf32>
    %cst_12 = arith.constant 9.99999974E-6 : f32
    %65 = vector.broadcast %cst_12 : f32 to vector<8x1xf32>
    %66 = arith.addf %62, %65 : vector<8x1xf32>
    %67 = math.rsqrt %66 : vector<8x1xf32>
    %68 = vector.broadcast %67 : vector<8x1xf32> to vector<8x256xf32>
    %69 = arith.mulf %64, %68 : vector<8x256xf32>
    %cst_13 = arith.constant 0.000000e+00 : f32
    %70 = vector.broadcast %cst_13 : f32 to vector<8x256xf32>
    %71 = arith.maximumf %69, %70 : vector<8x256xf32>
    %72 = vector.extract_strided_slice %71 {offsets = [0, 16], sizes = [8, 240], strides = [1, 1]} : vector<8x256xf32> to vector<8x240xf32>
    %73 = vector.extract_strided_slice %71 {offsets = [0, 0], sizes = [8, 16], strides = [1, 1]} : vector<8x256xf32> to vector<8x16xf32>
    %74 = tpu.concatenate %72, %73 in 1 : vector<8x240xf32>, vector<8x16xf32> -> vector<8x256xf32>
    %75 = vector.extract_strided_slice %71 {offsets = [0, 240], sizes = [8, 16], strides = [1, 1]} : vector<8x256xf32> to vector<8x16xf32>
    %76 = vector.extract_strided_slice %71 {offsets = [0, 0], sizes = [8, 240], strides = [1, 1]} : vector<8x256xf32> to vector<8x240xf32>
    %77 = tpu.concatenate %75, %76 in 1 : vector<8x16xf32>, vector<8x240xf32> -> vector<8x256xf32>
    %78 = arith.select %2, %74, %77 : vector<8x256xi1>, vector<8x256xf32>
    %79 = arith.select %4, %77, %74 : vector<8x256xi1>, vector<8x256xf32>
    %80 = vector.extract_strided_slice %78 {offsets = [0, 1], sizes = [8, 255], strides = [1, 1]} : vector<8x256xf32> to vector<8x255xf32>
    %81 = vector.extract_strided_slice %78 {offsets = [0, 0], sizes = [8, 1], strides = [1, 1]} : vector<8x256xf32> to vector<8x1xf32>
    %82 = tpu.concatenate %80, %81 in 1 : vector<8x255xf32>, vector<8x1xf32> -> vector<8x256xf32>
    %83 = vector.extract_strided_slice %78 {offsets = [0, 255], sizes = [8, 1], strides = [1, 1]} : vector<8x256xf32> to vector<8x1xf32>
    %84 = vector.extract_strided_slice %78 {offsets = [0, 0], sizes = [8, 255], strides = [1, 1]} : vector<8x256xf32> to vector<8x255xf32>
    %85 = tpu.concatenate %83, %84 in 1 : vector<8x1xf32>, vector<8x255xf32> -> vector<8x256xf32>
    %86 = arith.select %8, %82, %85 : vector<8x256xi1>, vector<8x256xf32>
    %87 = arith.select %10, %85, %82 : vector<8x256xi1>, vector<8x256xf32>
    %88 = vector.extract_strided_slice %71 {offsets = [0, 1], sizes = [8, 255], strides = [1, 1]} : vector<8x256xf32> to vector<8x255xf32>
    %89 = vector.extract_strided_slice %71 {offsets = [0, 0], sizes = [8, 1], strides = [1, 1]} : vector<8x256xf32> to vector<8x1xf32>
    %90 = tpu.concatenate %88, %89 in 1 : vector<8x255xf32>, vector<8x1xf32> -> vector<8x256xf32>
    %91 = vector.extract_strided_slice %71 {offsets = [0, 255], sizes = [8, 1], strides = [1, 1]} : vector<8x256xf32> to vector<8x1xf32>
    %92 = vector.extract_strided_slice %71 {offsets = [0, 0], sizes = [8, 255], strides = [1, 1]} : vector<8x256xf32> to vector<8x255xf32>
    %93 = tpu.concatenate %91, %92 in 1 : vector<8x1xf32>, vector<8x255xf32> -> vector<8x256xf32>
    %94 = arith.select %8, %90, %93 : vector<8x256xi1>, vector<8x256xf32>
    %95 = arith.select %10, %93, %90 : vector<8x256xi1>, vector<8x256xf32>
    %96 = vector.extract_strided_slice %79 {offsets = [0, 1], sizes = [8, 255], strides = [1, 1]} : vector<8x256xf32> to vector<8x255xf32>
    %97 = vector.extract_strided_slice %79 {offsets = [0, 0], sizes = [8, 1], strides = [1, 1]} : vector<8x256xf32> to vector<8x1xf32>
    %98 = tpu.concatenate %96, %97 in 1 : vector<8x255xf32>, vector<8x1xf32> -> vector<8x256xf32>
    %99 = vector.extract_strided_slice %79 {offsets = [0, 255], sizes = [8, 1], strides = [1, 1]} : vector<8x256xf32> to vector<8x1xf32>
    %100 = vector.extract_strided_slice %79 {offsets = [0, 0], sizes = [8, 255], strides = [1, 1]} : vector<8x256xf32> to vector<8x255xf32>
    %101 = tpu.concatenate %99, %100 in 1 : vector<8x1xf32>, vector<8x255xf32> -> vector<8x256xf32>
    %102 = arith.select %8, %98, %101 : vector<8x256xi1>, vector<8x256xf32>
    %103 = arith.select %10, %101, %98 : vector<8x256xi1>, vector<8x256xf32>
    %104 = tpu.concatenate %86, %78, %87, %94, %71, %95, %102, %79, %103 in 0 : vector<8x256xf32>, vector<8x256xf32>, vector<8x256xf32>, vector<8x256xf32>, vector<8x256xf32>, vector<8x256xf32>, vector<8x256xf32>, vector<8x256xf32>, vector<8x256xf32> -> vector<72x256xf32>
    %105 = arith.truncf %104 : vector<72x256xf32> to vector<72x256xbf16>
    %cst_14 = arith.constant dense<0.000000e+00> : vector<8x256xf32>
    %106 = tpu.matmul %12, %105, %cst_14 {dimension_numbers = #tpu.dot_dimension_numbers<[1], [0], [0], [1], [0, 0, 1, 1], [], []>} : vector<8x72xbf16>, vector<72x256xbf16>, vector<8x256xf32> -> vector<8x256xf32>
    %cst_15 = arith.constant dense<0.000000e+00> : vector<8xf32>
    %107 = vector.multi_reduction <add>, %106, %cst_15 [1] : vector<8x256xf32> to vector<8xf32>
    %108 = vector.shape_cast %107 : vector<8xf32> to vector<8x1xf32>
    %cst_16 = arith.constant 2.560000e+02 : f32
    %109 = vector.broadcast %cst_16 : f32 to vector<8x1xf32>
    %110 = arith.divf %108, %109 : vector<8x1xf32>
    %111 = arith.mulf %106, %106 : vector<8x256xf32>
    %cst_17 = arith.constant dense<0.000000e+00> : vector<8xf32>
    %112 = vector.multi_reduction <add>, %111, %cst_17 [1] : vector<8x256xf32> to vector<8xf32>
    %113 = vector.shape_cast %112 : vector<8xf32> to vector<8x1xf32>
    %cst_18 = arith.constant 2.560000e+02 : f32
    %114 = vector.broadcast %cst_18 : f32 to vector<8x1xf32>
    %115 = arith.divf %113, %114 : vector<8x1xf32>
    %116 = arith.mulf %110, %110 : vector<8x1xf32>
    %117 = arith.subf %115, %116 : vector<8x1xf32>
    %cst_19 = arith.constant 0.000000e+00 : f32
    %118 = vector.broadcast %cst_19 : f32 to vector<8x1xf32>
    %119 = arith.maximumf %117, %118 : vector<8x1xf32>
    %120 = vector.broadcast %110 : vector<8x1xf32> to vector<8x256xf32>
    %121 = arith.subf %106, %120 : vector<8x256xf32>
    %cst_20 = arith.constant 9.99999974E-6 : f32
    %122 = vector.broadcast %cst_20 : f32 to vector<8x1xf32>
    %123 = arith.addf %119, %122 : vector<8x1xf32>
    %124 = math.rsqrt %123 : vector<8x1xf32>
    %125 = vector.broadcast %124 : vector<8x1xf32> to vector<8x256xf32>
    %126 = arith.mulf %121, %125 : vector<8x256xf32>
    %127 = arith.addf %14, %126 : vector<8x256xf32>
    %c0_21 = arith.constant 0 : index
    %c0_22 = arith.constant 0 : index
    %c0_23 = arith.constant 0 : index
    %128 = vector.load %arg4[%c0_21, %c0_22, %c0_23] : memref<2x8x256xf32, #tpu.memory_space<vmem>>, vector<1x8x256xf32>
    %129 = vector.shape_cast %128 : vector<1x8x256xf32> to vector<8x256xf32>
    %130 = vector.shape_cast %127 : vector<8x256xf32> to vector<1x8x256xf32>
    tpu.vector_store %arg4[%c0_21, %c0_22, %c0_23], %130 {strides = array<i32>} : memref<2x8x256xf32, #tpu.memory_space<vmem>>, vector<1x8x256xf32>,
    %c1 = arith.constant 1 : index
    %c0_24 = arith.constant 0 : index
    %c0_25 = arith.constant 0 : index
    %131 = vector.load %arg1[%c1, %c0_24, %c0_25] : memref<2x8x256xf32, #tpu.memory_space<vmem>>, vector<1x8x256xf32>
    %132 = vector.shape_cast %131 : vector<1x8x256xf32> to vector<8x256xf32>
    %133 = vector.extract_strided_slice %132 {offsets = [0, 16], sizes = [8, 240], strides = [1, 1]} : vector<8x256xf32> to vector<8x240xf32>
    %134 = vector.extract_strided_slice %132 {offsets = [0, 0], sizes = [8, 16], strides = [1, 1]} : vector<8x256xf32> to vector<8x16xf32>
    %135 = tpu.concatenate %133, %134 in 1 : vector<8x240xf32>, vector<8x16xf32> -> vector<8x256xf32>
    %136 = vector.extract_strided_slice %132 {offsets = [0, 240], sizes = [8, 16], strides = [1, 1]} : vector<8x256xf32> to vector<8x16xf32>
    %137 = vector.extract_strided_slice %132 {offsets = [0, 0], sizes = [8, 240], strides = [1, 1]} : vector<8x256xf32> to vector<8x240xf32>
    %138 = tpu.concatenate %136, %137 in 1 : vector<8x16xf32>, vector<8x240xf32> -> vector<8x256xf32>
    %139 = arith.select %2, %135, %138 : vector<8x256xi1>, vector<8x256xf32>
    %140 = arith.select %4, %138, %135 : vector<8x256xi1>, vector<8x256xf32>
    %141 = vector.extract_strided_slice %139 {offsets = [0, 1], sizes = [8, 255], strides = [1, 1]} : vector<8x256xf32> to vector<8x255xf32>
    %142 = vector.extract_strided_slice %139 {offsets = [0, 0], sizes = [8, 1], strides = [1, 1]} : vector<8x256xf32> to vector<8x1xf32>
    %143 = tpu.concatenate %141, %142 in 1 : vector<8x255xf32>, vector<8x1xf32> -> vector<8x256xf32>
    %144 = vector.extract_strided_slice %139 {offsets = [0, 255], sizes = [8, 1], strides = [1, 1]} : vector<8x256xf32> to vector<8x1xf32>
    %145 = vector.extract_strided_slice %139 {offsets = [0, 0], sizes = [8, 255], strides = [1, 1]} : vector<8x256xf32> to vector<8x255xf32>
    %146 = tpu.concatenate %144, %145 in 1 : vector<8x1xf32>, vector<8x255xf32> -> vector<8x256xf32>
    %147 = arith.select %8, %143, %146 : vector<8x256xi1>, vector<8x256xf32>
    %148 = arith.select %10, %146, %143 : vector<8x256xi1>, vector<8x256xf32>
    %149 = vector.extract_strided_slice %132 {offsets = [0, 1], sizes = [8, 255], strides = [1, 1]} : vector<8x256xf32> to vector<8x255xf32>
    %150 = vector.extract_strided_slice %132 {offsets = [0, 0], sizes = [8, 1], strides = [1, 1]} : vector<8x256xf32> to vector<8x1xf32>
    %151 = tpu.concatenate %149, %150 in 1 : vector<8x255xf32>, vector<8x1xf32> -> vector<8x256xf32>
    %152 = vector.extract_strided_slice %132 {offsets = [0, 255], sizes = [8, 1], strides = [1, 1]} : vector<8x256xf32> to vector<8x1xf32>
    %153 = vector.extract_strided_slice %132 {offsets = [0, 0], sizes = [8, 255], strides = [1, 1]} : vector<8x256xf32> to vector<8x255xf32>
    %154 = tpu.concatenate %152, %153 in 1 : vector<8x1xf32>, vector<8x255xf32> -> vector<8x256xf32>
    %155 = arith.select %8, %151, %154 : vector<8x256xi1>, vector<8x256xf32>
    %156 = arith.select %10, %154, %151 : vector<8x256xi1>, vector<8x256xf32>
    %157 = vector.extract_strided_slice %140 {offsets = [0, 1], sizes = [8, 255], strides = [1, 1]} : vector<8x256xf32> to vector<8x255xf32>
    %158 = vector.extract_strided_slice %140 {offsets = [0, 0], sizes = [8, 1], strides = [1, 1]} : vector<8x256xf32> to vector<8x1xf32>
    %159 = tpu.concatenate %157, %158 in 1 : vector<8x255xf32>, vector<8x1xf32> -> vector<8x256xf32>
    %160 = vector.extract_strided_slice %140 {offsets = [0, 255], sizes = [8, 1], strides = [1, 1]} : vector<8x256xf32> to vector<8x1xf32>
    %161 = vector.extract_strided_slice %140 {offsets = [0, 0], sizes = [8, 255], strides = [1, 1]} : vector<8x256xf32> to vector<8x255xf32>
    %162 = tpu.concatenate %160, %161 in 1 : vector<8x1xf32>, vector<8x255xf32> -> vector<8x256xf32>
    %163 = arith.select %8, %159, %162 : vector<8x256xi1>, vector<8x256xf32>
    %164 = arith.select %10, %162, %159 : vector<8x256xi1>, vector<8x256xf32>
    %165 = tpu.concatenate %147, %139, %148, %155, %132, %156, %163, %140, %164 in 0 : vector<8x256xf32>, vector<8x256xf32>, vector<8x256xf32>, vector<8x256xf32>, vector<8x256xf32>, vector<8x256xf32>, vector<8x256xf32>, vector<8x256xf32>, vector<8x256xf32> -> vector<72x256xf32>
    %166 = arith.truncf %165 : vector<72x256xf32> to vector<72x256xbf16>
    %cst_26 = arith.constant dense<0.000000e+00> : vector<8x256xf32>
    %167 = tpu.matmul %11, %166, %cst_26 {dimension_numbers = #tpu.dot_dimension_numbers<[1], [0], [0], [1], [0, 0, 1, 1], [], []>} : vector<8x72xbf16>, vector<72x256xbf16>, vector<8x256xf32> -> vector<8x256xf32>
    %cst_27 = arith.constant dense<0.000000e+00> : vector<8xf32>
    %168 = vector.multi_reduction <add>, %167, %cst_27 [1] : vector<8x256xf32> to vector<8xf32>
    %169 = vector.shape_cast %168 : vector<8xf32> to vector<8x1xf32>
    %cst_28 = arith.constant 2.560000e+02 : f32
    %170 = vector.broadcast %cst_28 : f32 to vector<8x1xf32>
    %171 = arith.divf %169, %170 : vector<8x1xf32>
    %172 = arith.mulf %167, %167 : vector<8x256xf32>
    %cst_29 = arith.constant dense<0.000000e+00> : vector<8xf32>
    %173 = vector.multi_reduction <add>, %172, %cst_29 [1] : vector<8x256xf32> to vector<8xf32>
    %174 = vector.shape_cast %173 : vector<8xf32> to vector<8x1xf32>
    %cst_30 = arith.constant 2.560000e+02 : f32
    %175 = vector.broadcast %cst_30 : f32 to vector<8x1xf32>
    %176 = arith.divf %174, %175 : vector<8x1xf32>
    %177 = arith.mulf %171, %171 : vector<8x1xf32>
    %178 = arith.subf %176, %177 : vector<8x1xf32>
    %cst_31 = arith.constant 0.000000e+00 : f32
    %179 = vector.broadcast %cst_31 : f32 to vector<8x1xf32>
    %180 = arith.maximumf %178, %179 : vector<8x1xf32>
    %181 = vector.broadcast %171 : vector<8x1xf32> to vector<8x256xf32>
    %182 = arith.subf %167, %181 : vector<8x256xf32>
    %cst_32 = arith.constant 9.99999974E-6 : f32
    %183 = vector.broadcast %cst_32 : f32 to vector<8x1xf32>
    %184 = arith.addf %180, %183 : vector<8x1xf32>
    %185 = math.rsqrt %184 : vector<8x1xf32>
    %186 = vector.broadcast %185 : vector<8x1xf32> to vector<8x256xf32>
    %187 = arith.mulf %182, %186 : vector<8x256xf32>
    %cst_33 = arith.constant 0.000000e+00 : f32
    %188 = vector.broadcast %cst_33 : f32 to vector<8x256xf32>
    %189 = arith.maximumf %187, %188 : vector<8x256xf32>
    %190 = vector.extract_strided_slice %189 {offsets = [0, 16], sizes = [8, 240], strides = [1, 1]} : vector<8x256xf32> to vector<8x240xf32>
    %191 = vector.extract_strided_slice %189 {offsets = [0, 0], sizes = [8, 16], strides = [1, 1]} : vector<8x256xf32> to vector<8x16xf32>
    %192 = tpu.concatenate %190, %191 in 1 : vector<8x240xf32>, vector<8x16xf32> -> vector<8x256xf32>
    %193 = vector.extract_strided_slice %189 {offsets = [0, 240], sizes = [8, 16], strides = [1, 1]} : vector<8x256xf32> to vector<8x16xf32>
    %194 = vector.extract_strided_slice %189 {offsets = [0, 0], sizes = [8, 240], strides = [1, 1]} : vector<8x256xf32> to vector<8x240xf32>
    %195 = tpu.concatenate %193, %194 in 1 : vector<8x16xf32>, vector<8x240xf32> -> vector<8x256xf32>
    %196 = arith.select %2, %192, %195 : vector<8x256xi1>, vector<8x256xf32>
    %197 = arith.select %4, %195, %192 : vector<8x256xi1>, vector<8x256xf32>
    %198 = vector.extract_strided_slice %196 {offsets = [0, 1], sizes = [8, 255], strides = [1, 1]} : vector<8x256xf32> to vector<8x255xf32>
    %199 = vector.extract_strided_slice %196 {offsets = [0, 0], sizes = [8, 1], strides = [1, 1]} : vector<8x256xf32> to vector<8x1xf32>
    %200 = tpu.concatenate %198, %199 in 1 : vector<8x255xf32>, vector<8x1xf32> -> vector<8x256xf32>
    %201 = vector.extract_strided_slice %196 {offsets = [0, 255], sizes = [8, 1], strides = [1, 1]} : vector<8x256xf32> to vector<8x1xf32>
    %202 = vector.extract_strided_slice %196 {offsets = [0, 0], sizes = [8, 255], strides = [1, 1]} : vector<8x256xf32> to vector<8x255xf32>
    %203 = tpu.concatenate %201, %202 in 1 : vector<8x1xf32>, vector<8x255xf32> -> vector<8x256xf32>
    %204 = arith.select %8, %200, %203 : vector<8x256xi1>, vector<8x256xf32>
    %205 = arith.select %10, %203, %200 : vector<8x256xi1>, vector<8x256xf32>
    %206 = vector.extract_strided_slice %189 {offsets = [0, 1], sizes = [8, 255], strides = [1, 1]} : vector<8x256xf32> to vector<8x255xf32>
    %207 = vector.extract_strided_slice %189 {offsets = [0, 0], sizes = [8, 1], strides = [1, 1]} : vector<8x256xf32> to vector<8x1xf32>
    %208 = tpu.concatenate %206, %207 in 1 : vector<8x255xf32>, vector<8x1xf32> -> vector<8x256xf32>
    %209 = vector.extract_strided_slice %189 {offsets = [0, 255], sizes = [8, 1], strides = [1, 1]} : vector<8x256xf32> to vector<8x1xf32>
    %210 = vector.extract_strided_slice %189 {offsets = [0, 0], sizes = [8, 255], strides = [1, 1]} : vector<8x256xf32> to vector<8x255xf32>
    %211 = tpu.concatenate %209, %210 in 1 : vector<8x1xf32>, vector<8x255xf32> -> vector<8x256xf32>
    %212 = arith.select %8, %208, %211 : vector<8x256xi1>, vector<8x256xf32>
    %213 = arith.select %10, %211, %208 : vector<8x256xi1>, vector<8x256xf32>
    %214 = vector.extract_strided_slice %197 {offsets = [0, 1], sizes = [8, 255], strides = [1, 1]} : vector<8x256xf32> to vector<8x255xf32>
    %215 = vector.extract_strided_slice %197 {offsets = [0, 0], sizes = [8, 1], strides = [1, 1]} : vector<8x256xf32> to vector<8x1xf32>
    %216 = tpu.concatenate %214, %215 in 1 : vector<8x255xf32>, vector<8x1xf32> -> vector<8x256xf32>
    %217 = vector.extract_strided_slice %197 {offsets = [0, 255], sizes = [8, 1], strides = [1, 1]} : vector<8x256xf32> to vector<8x1xf32>
    %218 = vector.extract_strided_slice %197 {offsets = [0, 0], sizes = [8, 255], strides = [1, 1]} : vector<8x256xf32> to vector<8x255xf32>
    %219 = tpu.concatenate %217, %218 in 1 : vector<8x1xf32>, vector<8x255xf32> -> vector<8x256xf32>
    %220 = arith.select %8, %216, %219 : vector<8x256xi1>, vector<8x256xf32>
    %221 = arith.select %10, %219, %216 : vector<8x256xi1>, vector<8x256xf32>
    %222 = tpu.concatenate %204, %196, %205, %212, %189, %213, %220, %197, %221 in 0 : vector<8x256xf32>, vector<8x256xf32>, vector<8x256xf32>, vector<8x256xf32>, vector<8x256xf32>, vector<8x256xf32>, vector<8x256xf32>, vector<8x256xf32>, vector<8x256xf32> -> vector<72x256xf32>
    %223 = arith.truncf %222 : vector<72x256xf32> to vector<72x256xbf16>
    %cst_34 = arith.constant dense<0.000000e+00> : vector<8x256xf32>
    %224 = tpu.matmul %12, %223, %cst_34 {dimension_numbers = #tpu.dot_dimension_numbers<[1], [0], [0], [1], [0, 0, 1, 1], [], []>} : vector<8x72xbf16>, vector<72x256xbf16>, vector<8x256xf32> -> vector<8x256xf32>
    %cst_35 = arith.constant dense<0.000000e+00> : vector<8xf32>
    %225 = vector.multi_reduction <add>, %224, %cst_35 [1] : vector<8x256xf32> to vector<8xf32>
    %226 = vector.shape_cast %225 : vector<8xf32> to vector<8x1xf32>
    %cst_36 = arith.constant 2.560000e+02 : f32
    %227 = vector.broadcast %cst_36 : f32 to vector<8x1xf32>
    %228 = arith.divf %226, %227 : vector<8x1xf32>
    %229 = arith.mulf %224, %224 : vector<8x256xf32>
    %cst_37 = arith.constant dense<0.000000e+00> : vector<8xf32>
    %230 = vector.multi_reduction <add>, %229, %cst_37 [1] : vector<8x256xf32> to vector<8xf32>
    %231 = vector.shape_cast %230 : vector<8xf32> to vector<8x1xf32>
    %cst_38 = arith.constant 2.560000e+02 : f32
    %232 = vector.broadcast %cst_38 : f32 to vector<8x1xf32>
    %233 = arith.divf %231, %232 : vector<8x1xf32>
    %234 = arith.mulf %228, %228 : vector<8x1xf32>
    %235 = arith.subf %233, %234 : vector<8x1xf32>
    %cst_39 = arith.constant 0.000000e+00 : f32
    %236 = vector.broadcast %cst_39 : f32 to vector<8x1xf32>
    %237 = arith.maximumf %235, %236 : vector<8x1xf32>
    %238 = vector.broadcast %228 : vector<8x1xf32> to vector<8x256xf32>
    %239 = arith.subf %224, %238 : vector<8x256xf32>
    %cst_40 = arith.constant 9.99999974E-6 : f32
    %240 = vector.broadcast %cst_40 : f32 to vector<8x1xf32>
    %241 = arith.addf %237, %240 : vector<8x1xf32>
    %242 = math.rsqrt %241 : vector<8x1xf32>
    %243 = vector.broadcast %242 : vector<8x1xf32> to vector<8x256xf32>
    %244 = arith.mulf %239, %243 : vector<8x256xf32>
    %245 = arith.addf %132, %244 : vector<8x256xf32>
    %c1_41 = arith.constant 1 : index
    %c0_42 = arith.constant 0 : index
    %c0_43 = arith.constant 0 : index
    %246 = vector.load %arg4[%c1_41, %c0_42, %c0_43] : memref<2x8x256xf32, #tpu.memory_space<vmem>>, vector<1x8x256xf32>
    %247 = vector.shape_cast %246 : vector<1x8x256xf32> to vector<8x256xf32>
    %248 = vector.shape_cast %245 : vector<8x256xf32> to vector<1x8x256xf32>
    tpu.vector_store %arg4[%c1_41, %c0_42, %c0_43], %248 {strides = array<i32>} : memref<2x8x256xf32, #tpu.memory_space<vmem>>, vector<1x8x256xf32>,
    return
  }
  func.func @transform_0(%arg0: i32) -> (i32, i32, i32) {
    %c0_i32 = arith.constant 0 : i32
    %c0_i32_0 = arith.constant 0 : i32
    %c0_i32_1 = arith.constant 0 : i32
    return %arg0, %c0_i32, %c0_i32_0 : i32, i32, i32
  }
  func.func @transform_1(%arg0: i32) -> (i32, i32) {
    %c0_i32 = arith.constant 0 : i32
    %c0_i32_0 = arith.constant 0 : i32
    %c0_i32_1 = arith.constant 0 : i32
    return %c0_i32, %c0_i32_0 : i32, i32
  }
  func.func @transform_2(%arg0: i32) -> (i32, i32) {
    %c0_i32 = arith.constant 0 : i32
    %c0_i32_0 = arith.constant 0 : i32
    %c0_i32_1 = arith.constant 0 : i32
    return %c0_i32, %c0_i32_0 : i32, i32
  }
  func.func @transform_3(%arg0: i32) -> (i32, i32, i32) {
    %c0_i32 = arith.constant 0 : i32
    %c0_i32_0 = arith.constant 0 : i32
    %c0_i32_1 = arith.constant 0 : i32
    return %arg0, %c0_i32, %c0_i32_0 : i32, i32, i32
  }
}

</mosaic_0001>

<llo_original>
// kernel: resnet_block_forward.1
$region0: #{resnet_block_forward.1}
  #allocation0 [shape = 'u32[]', space=smem, size = 0x4, offset = 0x4, fixed_abs, tag = 'smem constant byte address 0x4 - core index']
  #allocation1 [shape = 'u32[144,128]{1,0:T(1,128)}', space=vmem, size = 0x12000, scoped, tag = 'internal scratch']
  %s0 = inlined_call_operand.vmem [shape: f32[2,8,256], index: 0, kind: input, shape index: {}, may-alias: {0,3}]
  %s1 = inlined_call_operand.vmem [shape: bf16[8,72], index: 1, kind: input, shape index: {}]
  %s2 = inlined_call_operand.vmem [shape: bf16[8,72], index: 2, kind: input, shape index: {}]
  %s3 = inlined_call_operand.vmem [shape: f32[2,8,256], index: 3, kind: output, shape index: {}, may-alias: {0,3}]
  %s4 = sld [smem:[#allocation0]]
  $region22: #{resnet_block_forward.1} parent=0
    _
  %s6 = ssub.s32 1, %s4
  %s7 = scalar_select 0, %s6, %s4
  // Predicated region
  $region2: #{resnet_block_forward.1} parent=0 // pred_check
    _
  $region3: #{resnet_block_forward.1} parent=0 // pred_check_branch
    %9 = sbr.rel (0) target = $region5
  $region4: #{resnet_block_forward.1} parent=0 // pred_region
    _
  $region5: #{resnet_block_forward.1} parent=0 // pred_fallthru
    _
  // Predicated region
  $region6: #{resnet_block_forward.1} parent=0 // pred_check
    _
  $region7: #{resnet_block_forward.1} parent=0 // pred_check_branch
    %11 = sbr.rel (0) target = $region9
  $region8: #{resnet_block_forward.1} parent=0 // pred_region
    _
  $region9: #{resnet_block_forward.1} parent=0 // pred_fallthru
    _
  // Predicated region
  $region10: #{resnet_block_forward.1} parent=0 // pred_check
    _
  $region11: #{resnet_block_forward.1} parent=0 // pred_check_branch
    %13 = sbr.rel (0) target = $region13
  $region12: #{resnet_block_forward.1} parent=0 // pred_region
    _
  $region13: #{resnet_block_forward.1} parent=0 // pred_fallthru
    _
  %v15 = vlaneseq
  %v16 = vand.u32 %v15, 127
  %v17 = vadd.s32 %v16, 128
  %vm18 = vcmp.lt.s32.totalorder %v16, 16
  %vm19 = vcmp.lt.s32.totalorder %v17, 16
  %vm20 = vcmp.ge.s32.totalorder %v16, 240
  %vm21 = vcmp.ge.s32.totalorder %v17, 240
  %v22 = vand.u32 %v16, 15
  %v23 = vand.u32 %v17, 15
  %vm24 = vcmp.eq.s32.totalorder %v22, 0
  %vm25 = vcmp.eq.s32.totalorder %v23, 0
  %vm26 = vcmp.eq.s32.totalorder %v22, 15
  %vm27 = vcmp.eq.s32.totalorder %v23, 15
  %v28 = vld [vmem:[%s1] sm:$0xf]
  %v29 = vld [vmem:[%s2] sm:$0xf]
  %v30 = vld [vmem:[%s0] sm:$0xff]
  %v31 = vld [vmem:[%s0 + $0x8] sm:$0xff]
  %34 = vrot.lane.b32.xlu0 %v30, 112
  %v35 = vpop.permute.xlu0 %34
  %36 = vrot.lane.b32.xlu0 %v31, 112
  %v37 = vpop.permute.xlu0 %36
  %vm38 = vcmask 916480
  %v39 = vsel %vm38, %v35, %v37
  %v43 = vsel %vm38, %v37, %v35
  %44 = vrot.lane.b32.xlu0 %v31, 16
  %v45 = vpop.permute.xlu0 %44
  %47 = vrot.lane.b32.xlu0 %v30, 16
  %v48 = vpop.permute.xlu0 %47
  %vm49 = vcmask 130048
  %v50 = vsel %vm49, %v48, %v45
  %v53 = vsel %vm49, %v45, %v48
  %v54 = vsel %vm18, %v39, %v53
  %v55 = vsel %vm19, %v43, %v50
  %v56 = vsel %vm20, %v53, %v39
  %v57 = vsel %vm21, %v50, %v43
  %60 = vrot.lane.b32.xlu0 %v54, 127
  %v61 = vpop.permute.xlu0 %60
  %62 = vrot.lane.b32.xlu0 %v55, 127
  %v63 = vpop.permute.xlu0 %62
  %vm64 = vcmask 1039360
  %v65 = vsel %vm64, %v61, %v63
  %v69 = vsel %vm64, %v63, %v61
  %70 = vrot.lane.b32.xlu0 %v55, 1
  %v71 = vpop.permute.xlu0 %70
  %73 = vrot.lane.b32.xlu0 %v54, 1
  %v74 = vpop.permute.xlu0 %73
  %vm75 = vcmask 7168
  %v76 = vsel %vm75, %v74, %v71
  %v79 = vsel %vm75, %v71, %v74
  %v80 = vsel %vm24, %v65, %v79
  %v81 = vsel %vm25, %v69, %v76
  %v82 = vsel %vm26, %v79, %v65
  %v83 = vsel %vm27, %v76, %v69
  %84 = vrot.lane.b32.xlu0 %v30, 127
  %v85 = vpop.permute.xlu0 %84
  %86 = vrot.lane.b32.xlu0 %v31, 127
  %v87 = vpop.permute.xlu0 %86
  %v88 = vsel %vm64, %v85, %v87
  %v92 = vsel %vm64, %v87, %v85
  %93 = vrot.lane.b32.xlu0 %v31, 1
  %v94 = vpop.permute.xlu0 %93
  %96 = vrot.lane.b32.xlu0 %v30, 1
  %v97 = vpop.permute.xlu0 %96
  %v98 = vsel %vm75, %v97, %v94
  %v101 = vsel %vm75, %v94, %v97
  %v102 = vsel %vm24, %v88, %v101
  %v103 = vsel %vm25, %v92, %v98
  %v104 = vsel %vm26, %v101, %v88
  %v105 = vsel %vm27, %v98, %v92
  %108 = vrot.lane.b32.xlu0 %v56, 127
  %v109 = vpop.permute.xlu0 %108
  %110 = vrot.lane.b32.xlu0 %v57, 127
  %v111 = vpop.permute.xlu0 %110
  %v112 = vsel %vm64, %v109, %v111
  %v116 = vsel %vm64, %v111, %v109
  %117 = vrot.lane.b32.xlu0 %v57, 1
  %v118 = vpop.permute.xlu0 %117
  %120 = vrot.lane.b32.xlu0 %v56, 1
  %v121 = vpop.permute.xlu0 %120
  %v122 = vsel %vm75, %v121, %v118
  %v125 = vsel %vm75, %v118, %v121
  %v126 = vsel %vm24, %v112, %v125
  %v127 = vsel %vm25, %v116, %v122
  %v128 = vsel %vm26, %v125, %v112
  %v129 = vsel %vm27, %v122, %v116
  %v130 = vpack.c.bf16 %v54, %v80
  %v131 = vpack.c.bf16 %v55, %v81
  %v132 = vpack.c.bf16 %v102, %v82
  %v133 = vpack.c.bf16 %v103, %v83
  %v134 = vpack.c.bf16 %v104, %v30
  %v135 = vpack.c.bf16 %v105, %v31
  %v136 = vpack.c.bf16 %v56, %v126
  %v137 = vpack.c.bf16 %v57, %v127
  %v138 = vpack.c.bf16 %v128, %v128
  %v139 = vpack.c.bf16 %v129, %v129
  %vm140 = vcmask 588800
  %v142 = vsel %vm140, %v28, 0
  %vm144 = vcmask 1043456
  %v146 = vsel %vm144, %v138, 0
  %v149 = vsel %vm144, %v139, 0
  %151 = vmatprep.subr.bf16.mxu0 0
  %152 = vmatpush1.bf16.msra.mxu0 0
  %153 = vmatprep.subr.bf16.mxu0 0
  %154 = vmatpush1.bf16.msra.mxu0 0
  %155 = vmatprep.subr.bf16.mxu0 0
  %156 = vmatpush1.bf16.msra.mxu0 0
  %157 = vmatprep.subr.bf16.mxu0 %v149
  %158 = vmatpush1.bf16.msra.mxu0 %v146
  %159 = vmatprep.subr.bf16.mxu0 %v137
  %160 = vmatpush1.bf16.msra.mxu0 %v136
  %161 = vmatprep.subr.bf16.mxu0 %v135
  %162 = vmatpush1.bf16.msra.mxu0 %v134
  %163 = vmatprep.subr.bf16.mxu0 %v133
  %164 = vmatpush1.bf16.msra.mxu0 %v132
  %165 = vmatprep.subr.bf16.mxu0 %v131
  %166 = vmatpush1.bf16.msra.mxu0 %v130
  %167 = vmatprep.subr.bf16.mxu0 0
  %168 = vmatpush2.bf16.msra.mxu0 0
  %169 = vmatprep.subr.bf16.mxu0 0
  %170 = vmatpush2.bf16.msra.mxu0 0
  %171 = vmatprep.subr.bf16.mxu0 0
  %172 = vmatpush2.bf16.msra.mxu0 0
  %173 = vmatprep.subr.bf16.mxu0 0
  %174 = vmatpush2.bf16.msra.mxu0 0
  %175 = vmatprep.subr.bf16.mxu0 0
  %176 = vmatpush2.bf16.msra.mxu0 0
  %177 = vmatprep.subr.bf16.mxu0 0
  %178 = vmatpush2.bf16.msra.mxu0 0
  %179 = vmatprep.subr.bf16.mxu0 0
  %180 = vmatpush2.bf16.msra.mxu0 0
  %181 = vmatprep.subr.bf16.mxu0 0
  %182 = vmatpush2.bf16.msra.mxu0 0
  %183 = vmatprep.mubr.bf16.mxu0 0
  %184 = vmatmul.mubr.bf16.gmra.mxu0 %v142
  %v185 = vpop.f32.mrf.mxu0
  %v186 = vadd.f32 0.0, %v185
  %v187 = vpop.f32.mrf.mxu0
  %v188 = vadd.f32 0.0, %v187
  %v189 = vpop.f32.mrf.mxu0
  %v190 = vpop.f32.mrf.mxu0
  %191 = vdwg.mxu0
  %v192 = vadd.f32 %v186, %v188
  %193 = vadd.xlane.f32.xlu0 %v192
  %v194 = vpop.xlane.xlu0 %193
  %v195 = vrcp.pop 256.0
  %v196 = vmul.f32 %v194, %v195
  %v197 = vmul.f32 %v186, %v186
  %v198 = vmul.f32 %v188, %v188
  %v199 = vadd.f32 %v197, %v198
  %200 = vadd.xlane.f32.xlu0 %v199
  %v201 = vpop.xlane.xlu0 %200
  %v202 = vmul.f32 %v201, %v195
  %v203 = vmul.f32 %v196, %v196
  %v204 = vsub.f32 %v202, %v203
  %v205 = vmax.f32 %v204, 0.0
  %v206 = vsub.f32 %v186, %v196
  %v207 = vsub.f32 %v188, %v196
  %v208 = vadd.f32 %v205, 1e-05
  %v209 = vrsqrt.pop %v208
  %v210 = vmul.f32 %v206, %v209
  %v211 = vmul.f32 %v207, %v209
  %v212 = vmax.f32 %v210, 0.0
  %v213 = vmax.f32 %v211, 0.0
  %216 = vrot.lane.b32.xlu0 %v212, 112
  %v217 = vpop.permute.xlu0 %216
  %218 = vrot.lane.b32.xlu0 %v213, 112
  %v219 = vpop.permute.xlu0 %218
  %v220 = vsel %vm38, %v217, %v219
  %v224 = vsel %vm38, %v219, %v217
  %225 = vrot.lane.b32.xlu0 %v213, 16
  %v226 = vpop.permute.xlu0 %225
  %228 = vrot.lane.b32.xlu0 %v212, 16
  %v229 = vpop.permute.xlu0 %228
  %v230 = vsel %vm49, %v229, %v226
  %v233 = vsel %vm49, %v226, %v229
  %v234 = vsel %vm18, %v220, %v233
  %v235 = vsel %vm19, %v224, %v230
  %v236 = vsel %vm20, %v233, %v220
  %v237 = vsel %vm21, %v230, %v224
  %240 = vrot.lane.b32.xlu0 %v234, 127
  %v241 = vpop.permute.xlu0 %240
  %242 = vrot.lane.b32.xlu0 %v235, 127
  %v243 = vpop.permute.xlu0 %242
  %v244 = vsel %vm64, %v241, %v243
  %v248 = vsel %vm64, %v243, %v241
  %249 = vrot.lane.b32.xlu0 %v235, 1
  %v250 = vpop.permute.xlu0 %249
  %252 = vrot.lane.b32.xlu0 %v234, 1
  %v253 = vpop.permute.xlu0 %252
  %v254 = vsel %vm75, %v253, %v250
  %v257 = vsel %vm75, %v250, %v253
  %v258 = vsel %vm24, %v244, %v257
  %v259 = vsel %vm25, %v248, %v254
  %v260 = vsel %vm26, %v257, %v244
  %v261 = vsel %vm27, %v254, %v248
  %262 = vrot.lane.b32.xlu0 %v212, 127
  %v263 = vpop.permute.xlu0 %262
  %264 = vrot.lane.b32.xlu0 %v213, 127
  %v265 = vpop.permute.xlu0 %264
  %v266 = vsel %vm64, %v263, %v265
  %v270 = vsel %vm64, %v265, %v263
  %271 = vrot.lane.b32.xlu0 %v213, 1
  %v272 = vpop.permute.xlu0 %271
  %274 = vrot.lane.b32.xlu0 %v212, 1
  %v275 = vpop.permute.xlu0 %274
  %v276 = vsel %vm75, %v275, %v272
  %v279 = vsel %vm75, %v272, %v275
  %v280 = vsel %vm24, %v266, %v279
  %v281 = vsel %vm25, %v270, %v276
  %v282 = vsel %vm26, %v279, %v266
  %v283 = vsel %vm27, %v276, %v270
  %286 = vrot.lane.b32.xlu0 %v236, 127
  %v287 = vpop.permute.xlu0 %286
  %288 = vrot.lane.b32.xlu0 %v237, 127
  %v289 = vpop.permute.xlu0 %288
  %v290 = vsel %vm64, %v287, %v289
  %v294 = vsel %vm64, %v289, %v287
  %295 = vrot.lane.b32.xlu0 %v237, 1
  %v296 = vpop.permute.xlu0 %295
  %298 = vrot.lane.b32.xlu0 %v236, 1
  %v299 = vpop.permute.xlu0 %298
  %v300 = vsel %vm75, %v299, %v296
  %v303 = vsel %vm75, %v296, %v299
  %v304 = vsel %vm24, %v290, %v303
  %v305 = vsel %vm25, %v294, %v300
  %v306 = vsel %vm26, %v303, %v290
  %v307 = vsel %vm27, %v300, %v294
  %v308 = vpack.c.bf16 %v234, %v258
  %v309 = vpack.c.bf16 %v235, %v259
  %v310 = vpack.c.bf16 %v280, %v260
  %v311 = vpack.c.bf16 %v281, %v261
  %v312 = vpack.c.bf16 %v282, %v212
  %v313 = vpack.c.bf16 %v283, %v213
  %v314 = vpack.c.bf16 %v236, %v304
  %v315 = vpack.c.bf16 %v237, %v305
  %v316 = vpack.c.bf16 %v306, %v306
  %v317 = vpack.c.bf16 %v307, %v307
  %v319 = vsel %vm140, %v29, 0
  %v322 = vsel %vm144, %v316, 0
  %v325 = vsel %vm144, %v317, 0
  %327 = vmatprep.subr.bf16.mxu0 0
  %328 = vmatpush1.bf16.msra.mxu0 0
  %329 = vmatprep.subr.bf16.mxu0 0
  %330 = vmatpush1.bf16.msra.mxu0 0
  %331 = vmatprep.subr.bf16.mxu0 0
  %332 = vmatpush1.bf16.msra.mxu0 0
  %333 = vmatprep.subr.bf16.mxu0 %v325
  %334 = vmatpush1.bf16.msra.mxu0 %v322
  %335 = vmatprep.subr.bf16.mxu0 %v315
  %336 = vmatpush1.bf16.msra.mxu0 %v314
  %337 = vmatprep.subr.bf16.mxu0 %v313
  %338 = vmatpush1.bf16.msra.mxu0 %v312
  %339 = vmatprep.subr.bf16.mxu0 %v311
  %340 = vmatpush1.bf16.msra.mxu0 %v310
  %341 = vmatprep.subr.bf16.mxu0 %v309
  %342 = vmatpush1.bf16.msra.mxu0 %v308
  %343 = vmatprep.subr.bf16.mxu0 0
  %344 = vmatpush2.bf16.msra.mxu0 0
  %345 = vmatprep.subr.bf16.mxu0 0
  %346 = vmatpush2.bf16.msra.mxu0 0
  %347 = vmatprep.subr.bf16.mxu0 0
  %348 = vmatpush2.bf16.msra.mxu0 0
  %349 = vmatprep.subr.bf16.mxu0 0
  %350 = vmatpush2.bf16.msra.mxu0 0
  %351 = vmatprep.subr.bf16.mxu0 0
  %352 = vmatpush2.bf16.msra.mxu0 0
  %353 = vmatprep.subr.bf16.mxu0 0
  %354 = vmatpush2.bf16.msra.mxu0 0
  %355 = vmatprep.subr.bf16.mxu0 0
  %356 = vmatpush2.bf16.msra.mxu0 0
  %357 = vmatprep.subr.bf16.mxu0 0
  %358 = vmatpush2.bf16.msra.mxu0 0
  %359 = vmatprep.mubr.bf16.mxu0 0
  %360 = vmatmul.mubr.bf16.gmra.mxu0 %v319
  %v361 = vpop.f32.mrf.mxu0
  %v362 = vadd.f32 0.0, %v361
  %v363 = vpop.f32.mrf.mxu0
  %v364 = vadd.f32 0.0, %v363
  %v365 = vpop.f32.mrf.mxu0
  %v366 = vpop.f32.mrf.mxu0
  %367 = vdwg.mxu0
  %v368 = vadd.f32 %v362, %v364
  %369 = vadd.xlane.f32.xlu0 %v368
  %v370 = vpop.xlane.xlu0 %369
  %v371 = vmul.f32 %v370, %v195
  %v372 = vmul.f32 %v362, %v362
  %v373 = vmul.f32 %v364, %v364
  %v374 = vadd.f32 %v372, %v373
  %375 = vadd.xlane.f32.xlu0 %v374
  %v376 = vpop.xlane.xlu0 %375
  %v377 = vmul.f32 %v376, %v195
  %v378 = vmul.f32 %v371, %v371
  %v379 = vsub.f32 %v377, %v378
  %v380 = vmax.f32 %v379, 0.0
  %v381 = vsub.f32 %v362, %v371
  %v382 = vsub.f32 %v364, %v371
  %v383 = vadd.f32 %v380, 1e-05
  %v384 = vrsqrt.pop %v383
  %v385 = vmul.f32 %v381, %v384
  %v386 = vmul.f32 %v382, %v384
  %v387 = vadd.f32 %v30, %v385
  %v388 = vadd.f32 %v31, %v386
  %389 = vst [vmem:[%s3] sm:$0xff] %v387
  %390 = vst [vmem:[%s3 + $0x8] sm:$0xff] %v388
  %s391 = scalar_lea.vmem %s0, 16
  %v392 = vld [vmem:[%s391] sm:$0xff]
  %v393 = vld [vmem:[%s391 + $0x8] sm:$0xff]
  %396 = vrot.lane.b32.xlu0 %v392, 112
  %v397 = vpop.permute.xlu0 %396
  %398 = vrot.lane.b32.xlu0 %v393, 112
  %v399 = vpop.permute.xlu0 %398
  %v400 = vsel %vm38, %v397, %v399
  %v404 = vsel %vm38, %v399, %v397
  %405 = vrot.lane.b32.xlu0 %v393, 16
  %v406 = vpop.permute.xlu0 %405
  %408 = vrot.lane.b32.xlu0 %v392, 16
  %v409 = vpop.permute.xlu0 %408
  %v410 = vsel %vm49, %v409, %v406
  %v413 = vsel %vm49, %v406, %v409
  %v414 = vsel %vm18, %v400, %v413
  %v415 = vsel %vm19, %v404, %v410
  %v416 = vsel %vm20, %v413, %v400
  %v417 = vsel %vm21, %v410, %v404
  %420 = vrot.lane.b32.xlu0 %v414, 127
  %v421 = vpop.permute.xlu0 %420
  %422 = vrot.lane.b32.xlu0 %v415, 127
  %v423 = vpop.permute.xlu0 %422
  %v424 = vsel %vm64, %v421, %v423
  %v428 = vsel %vm64, %v423, %v421
  %429 = vrot.lane.b32.xlu0 %v415, 1
  %v430 = vpop.permute.xlu0 %429
  %432 = vrot.lane.b32.xlu0 %v414, 1
  %v433 = vpop.permute.xlu0 %432
  %v434 = vsel %vm75, %v433, %v430
  %v437 = vsel %vm75, %v430, %v433
  %v438 = vsel %vm24, %v424, %v437
  %v439 = vsel %vm25, %v428, %v434
  %v440 = vsel %vm26, %v437, %v424
  %v441 = vsel %vm27, %v434, %v428
  %442 = vrot.lane.b32.xlu0 %v392, 127
  %v443 = vpop.permute.xlu0 %442
  %444 = vrot.lane.b32.xlu0 %v393, 127
  %v445 = vpop.permute.xlu0 %444
  %v446 = vsel %vm64, %v443, %v445
  %v450 = vsel %vm64, %v445, %v443
  %451 = vrot.lane.b32.xlu0 %v393, 1
  %v452 = vpop.permute.xlu0 %451
  %454 = vrot.lane.b32.xlu0 %v392, 1
  %v455 = vpop.permute.xlu0 %454
  %v456 = vsel %vm75, %v455, %v452
  %v459 = vsel %vm75, %v452, %v455
  %v460 = vsel %vm24, %v446, %v459
  %v461 = vsel %vm25, %v450, %v456
  %v462 = vsel %vm26, %v459, %v446
  %v463 = vsel %vm27, %v456, %v450
  %466 = vrot.lane.b32.xlu0 %v416, 127
  %v467 = vpop.permute.xlu0 %466
  %468 = vrot.lane.b32.xlu0 %v417, 127
  %v469 = vpop.permute.xlu0 %468
  %v470 = vsel %vm64, %v467, %v469
  %v474 = vsel %vm64, %v469, %v467
  %475 = vrot.lane.b32.xlu0 %v417, 1
  %v476 = vpop.permute.xlu0 %475
  %478 = vrot.lane.b32.xlu0 %v416, 1
  %v479 = vpop.permute.xlu0 %478
  %v480 = vsel %vm75, %v479, %v476
  %v483 = vsel %vm75, %v476, %v479
  %v484 = vsel %vm24, %v470, %v483
  %v485 = vsel %vm25, %v474, %v480
  %v486 = vsel %vm26, %v483, %v470
  %v487 = vsel %vm27, %v480, %v474
  %v488 = vpack.c.bf16 %v414, %v438
  %v489 = vpack.c.bf16 %v415, %v439
  %v490 = vpack.c.bf16 %v460, %v440
  %v491 = vpack.c.bf16 %v461, %v441
  %v492 = vpack.c.bf16 %v462, %v392
  %v493 = vpack.c.bf16 %v463, %v393
  %v494 = vpack.c.bf16 %v416, %v484
  %v495 = vpack.c.bf16 %v417, %v485
  %v496 = vpack.c.bf16 %v486, %v486
  %v497 = vpack.c.bf16 %v487, %v487
  %v499 = vsel %vm144, %v496, 0
  %v502 = vsel %vm144, %v497, 0
  %504 = vmatprep.subr.bf16.mxu0 0
  %505 = vmatpush1.bf16.msra.mxu0 0
  %506 = vmatprep.subr.bf16.mxu0 0
  %507 = vmatpush1.bf16.msra.mxu0 0
  %508 = vmatprep.subr.bf16.mxu0 0
  %509 = vmatpush1.bf16.msra.mxu0 0
  %510 = vmatprep.subr.bf16.mxu0 %v502
  %511 = vmatpush1.bf16.msra.mxu0 %v499
  %512 = vmatprep.subr.bf16.mxu0 %v495
  %513 = vmatpush1.bf16.msra.mxu0 %v494
  %514 = vmatprep.subr.bf16.mxu0 %v493
  %515 = vmatpush1.bf16.msra.mxu0 %v492
  %516 = vmatprep.subr.bf16.mxu0 %v491
  %517 = vmatpush1.bf16.msra.mxu0 %v490
  %518 = vmatprep.subr.bf16.mxu0 %v489
  %519 = vmatpush1.bf16.msra.mxu0 %v488
  %520 = vmatprep.subr.bf16.mxu0 0
  %521 = vmatpush2.bf16.msra.mxu0 0
  %522 = vmatprep.subr.bf16.mxu0 0
  %523 = vmatpush2.bf16.msra.mxu0 0
  %524 = vmatprep.subr.bf16.mxu0 0
  %525 = vmatpush2.bf16.msra.mxu0 0
  %526 = vmatprep.subr.bf16.mxu0 0
  %527 = vmatpush2.bf16.msra.mxu0 0
  %528 = vmatprep.subr.bf16.mxu0 0
  %529 = vmatpush2.bf16.msra.mxu0 0
  %530 = vmatprep.subr.bf16.mxu0 0
  %531 = vmatpush2.bf16.msra.mxu0 0
  %532 = vmatprep.subr.bf16.mxu0 0
  %533 = vmatpush2.bf16.msra.mxu0 0
  %534 = vmatprep.subr.bf16.mxu0 0
  %535 = vmatpush2.bf16.msra.mxu0 0
  %536 = vmatprep.mubr.bf16.mxu0 0
  %537 = vmatmul.mubr.bf16.gmra.mxu0 %v142
  %v538 = vpop.f32.mrf.mxu0
  %v539 = vadd.f32 0.0, %v538
  %v540 = vpop.f32.mrf.mxu0
  %v541 = vadd.f32 0.0, %v540
  %v542 = vpop.f32.mrf.mxu0
  %v543 = vpop.f32.mrf.mxu0
  %544 = vdwg.mxu0
  %v545 = vadd.f32 %v539, %v541
  %546 = vadd.xlane.f32.xlu0 %v545
  %v547 = vpop.xlane.xlu0 %546
  %v548 = vmul.f32 %v547, %v195
  %v549 = vmul.f32 %v539, %v539
  %v550 = vmul.f32 %v541, %v541
  %v551 = vadd.f32 %v549, %v550
  %552 = vadd.xlane.f32.xlu0 %v551
  %v553 = vpop.xlane.xlu0 %552
  %v554 = vmul.f32 %v553, %v195
  %v555 = vmul.f32 %v548, %v548
  %v556 = vsub.f32 %v554, %v555
  %v557 = vmax.f32 %v556, 0.0
  %v558 = vsub.f32 %v539, %v548
  %v559 = vsub.f32 %v541, %v548
  %v560 = vadd.f32 %v557, 1e-05
  %v561 = vrsqrt.pop %v560
  %v562 = vmul.f32 %v558, %v561
  %v563 = vmul.f32 %v559, %v561
  %v564 = vmax.f32 %v562, 0.0
  %v565 = vmax.f32 %v563, 0.0
  %568 = vrot.lane.b32.xlu0 %v564, 112
  %v569 = vpop.permute.xlu0 %568
  %570 = vrot.lane.b32.xlu0 %v565, 112
  %v571 = vpop.permute.xlu0 %570
  %v572 = vsel %vm38, %v569, %v571
  %v576 = vsel %vm38, %v571, %v569
  %577 = vrot.lane.b32.xlu0 %v565, 16
  %v578 = vpop.permute.xlu0 %577
  %580 = vrot.lane.b32.xlu0 %v564, 16
  %v581 = vpop.permute.xlu0 %580
  %v582 = vsel %vm49, %v581, %v578
  %v585 = vsel %vm49, %v578, %v581
  %v586 = vsel %vm18, %v572, %v585
  %v587 = vsel %vm19, %v576, %v582
  %v588 = vsel %vm20, %v585, %v572
  %v589 = vsel %vm21, %v582, %v576
  %592 = vrot.lane.b32.xlu0 %v586, 127
  %v593 = vpop.permute.xlu0 %592
  %594 = vrot.lane.b32.xlu0 %v587, 127
  %v595 = vpop.permute.xlu0 %594
  %v596 = vsel %vm64, %v593, %v595
  %v600 = vsel %vm64, %v595, %v593
  %601 = vrot.lane.b32.xlu0 %v587, 1
  %v602 = vpop.permute.xlu0 %601
  %604 = vrot.lane.b32.xlu0 %v586, 1
  %v605 = vpop.permute.xlu0 %604
  %v606 = vsel %vm75, %v605, %v602
  %v609 = vsel %vm75, %v602, %v605
  %v610 = vsel %vm24, %v596, %v609
  %v611 = vsel %vm25, %v600, %v606
  %v612 = vsel %vm26, %v609, %v596
  %v613 = vsel %vm27, %v606, %v600
  %614 = vrot.lane.b32.xlu0 %v564, 127
  %v615 = vpop.permute.xlu0 %614
  %616 = vrot.lane.b32.xlu0 %v565, 127
  %v617 = vpop.permute.xlu0 %616
  %v618 = vsel %vm64, %v615, %v617
  %v622 = vsel %vm64, %v617, %v615
  %623 = vrot.lane.b32.xlu0 %v565, 1
  %v624 = vpop.permute.xlu0 %623
  %626 = vrot.lane.b32.xlu0 %v564, 1
  %v627 = vpop.permute.xlu0 %626
  %v628 = vsel %vm75, %v627, %v624
  %v631 = vsel %vm75, %v624, %v627
  %v632 = vsel %vm24, %v618, %v631
  %v633 = vsel %vm25, %v622, %v628
  %v634 = vsel %vm26, %v631, %v618
  %v635 = vsel %vm27, %v628, %v622
  %638 = vrot.lane.b32.xlu0 %v588, 127
  %v639 = vpop.permute.xlu0 %638
  %640 = vrot.lane.b32.xlu0 %v589, 127
  %v641 = vpop.permute.xlu0 %640
  %v642 = vsel %vm64, %v639, %v641
  %v646 = vsel %vm64, %v641, %v639
  %647 = vrot.lane.b32.xlu0 %v589, 1
  %v648 = vpop.permute.xlu0 %647
  %650 = vrot.lane.b32.xlu0 %v588, 1
  %v651 = vpop.permute.xlu0 %650
  %v652 = vsel %vm75, %v651, %v648
  %v655 = vsel %vm75, %v648, %v651
  %v656 = vsel %vm24, %v642, %v655
  %v657 = vsel %vm25, %v646, %v652
  %v658 = vsel %vm26, %v655, %v642
  %v659 = vsel %vm27, %v652, %v646
  %v660 = vpack.c.bf16 %v586, %v610
  %v661 = vpack.c.bf16 %v587, %v611
  %v662 = vpack.c.bf16 %v632, %v612
  %v663 = vpack.c.bf16 %v633, %v613
  %v664 = vpack.c.bf16 %v634, %v564
  %v665 = vpack.c.bf16 %v635, %v565
  %v666 = vpack.c.bf16 %v588, %v656
  %v667 = vpack.c.bf16 %v589, %v657
  %v668 = vpack.c.bf16 %v658, %v658
  %v669 = vpack.c.bf16 %v659, %v659
  %v671 = vsel %vm144, %v668, 0
  %v674 = vsel %vm144, %v669, 0
  %676 = vmatprep.subr.bf16.mxu0 0
  %677 = vmatpush1.bf16.msra.mxu0 0
  %678 = vmatprep.subr.bf16.mxu0 0
  %679 = vmatpush1.bf16.msra.mxu0 0
  %680 = vmatprep.subr.bf16.mxu0 0
  %681 = vmatpush1.bf16.msra.mxu0 0
  %682 = vmatprep.subr.bf16.mxu0 %v674
  %683 = vmatpush1.bf16.msra.mxu0 %v671
  %684 = vmatprep.subr.bf16.mxu0 %v667
  %685 = vmatpush1.bf16.msra.mxu0 %v666
  %686 = vmatprep.subr.bf16.mxu0 %v665
  %687 = vmatpush1.bf16.msra.mxu0 %v664
  %688 = vmatprep.subr.bf16.mxu0 %v663
  %689 = vmatpush1.bf16.msra.mxu0 %v662
  %690 = vmatprep.subr.bf16.mxu0 %v661
  %691 = vmatpush1.bf16.msra.mxu0 %v660
  %692 = vmatprep.subr.bf16.mxu0 0
  %693 = vmatpush2.bf16.msra.mxu0 0
  %694 = vmatprep.subr.bf16.mxu0 0
  %695 = vmatpush2.bf16.msra.mxu0 0
  %696 = vmatprep.subr.bf16.mxu0 0
  %697 = vmatpush2.bf16.msra.mxu0 0
  %698 = vmatprep.subr.bf16.mxu0 0
  %699 = vmatpush2.bf16.msra.mxu0 0
  %700 = vmatprep.subr.bf16.mxu0 0
  %701 = vmatpush2.bf16.msra.mxu0 0
  %702 = vmatprep.subr.bf16.mxu0 0
  %703 = vmatpush2.bf16.msra.mxu0 0
  %704 = vmatprep.subr.bf16.mxu0 0
  %705 = vmatpush2.bf16.msra.mxu0 0
  %706 = vmatprep.subr.bf16.mxu0 0
  %707 = vmatpush2.bf16.msra.mxu0 0
  %708 = vmatprep.mubr.bf16.mxu0 0
  %709 = vmatmul.mubr.bf16.gmra.mxu0 %v319
  %v710 = vpop.f32.mrf.mxu0
  %v711 = vadd.f32 0.0, %v710
  %v712 = vpop.f32.mrf.mxu0
  %v713 = vadd.f32 0.0, %v712
  %v714 = vpop.f32.mrf.mxu0
  %v715 = vpop.f32.mrf.mxu0
  %716 = vdwg.mxu0
  %v717 = vadd.f32 %v711, %v713
  %718 = vadd.xlane.f32.xlu0 %v717
  %v719 = vpop.xlane.xlu0 %718
  %v720 = vmul.f32 %v719, %v195
  %v721 = vmul.f32 %v711, %v711
  %v722 = vmul.f32 %v713, %v713
  %v723 = vadd.f32 %v721, %v722
  %724 = vadd.xlane.f32.xlu0 %v723
  %v725 = vpop.xlane.xlu0 %724
  %v726 = vmul.f32 %v725, %v195
  %v727 = vmul.f32 %v720, %v720
  %v728 = vsub.f32 %v726, %v727
  %v729 = vmax.f32 %v728, 0.0
  %v730 = vsub.f32 %v711, %v720
  %v731 = vsub.f32 %v713, %v720
  %v732 = vadd.f32 %v729, 1e-05
  %v733 = vrsqrt.pop %v732
  %v734 = vmul.f32 %v730, %v733
  %v735 = vmul.f32 %v731, %v733
  %v736 = vadd.f32 %v392, %v734
  %v737 = vadd.f32 %v393, %v735
  %s738 = scalar_lea.vmem %s3, 16
  %739 = vst [vmem:[%s738] sm:$0xff] %v736
  %740 = vst [vmem:[%s738 + $0x8] sm:$0xff] %v737
  // Predicated region
  $region14: #{resnet_block_forward.1} parent=0 // pred_check
    _
  $region15: #{resnet_block_forward.1} parent=0 // pred_check_branch
    %742 = sbr.rel (0) target = $region17
  $region16: #{resnet_block_forward.1} parent=0 // pred_region
    _
  $region17: #{resnet_block_forward.1} parent=0 // pred_fallthru
    _
  // Predicated region
  $region18: #{resnet_block_forward.1} parent=0 // pred_check
    _
  $region19: #{resnet_block_forward.1} parent=0 // pred_check_branch
    %744 = sbr.rel (0) target = $region21
  $region20: #{resnet_block_forward.1} parent=0 // pred_region
    _
  $region21: #{resnet_block_forward.1} parent=0 // pred_fallthru
    _

</llo_original>
